<compile_context>
chip_gen: v7x
topology: tpu7x:2x2x1
jax: 0.10.0
libtpu: 0.0.40
codegen_flags: <defaults>
</compile_context>

<pallas_src>
import math

import jax
import jax.numpy as jnp
from jax.experimental import pallas as pl
from jax.experimental.pallas import tpu as pltpu

_LANE = 128      # vreg lane count    (last-dim tiling granularity)
_SUBLANE = 8     # vreg sublane count (second-minor tiling granularity)


# ----------------------------------------------------------------------------
# Permutation analysis
# ----------------------------------------------------------------------------
def _grouped_swap(perm):
    """Detect perm == range(p) ++ range(q, r) ++ range(p, q) ++ range(r, n).

    Returns (p, q, r) if the permutation keeps a leading prefix [0, p) and a
    trailing suffix [r, n) fixed and swaps the two contiguous groups [p, q)
    and [q, r); returns None otherwise (including for the identity).
    """
    perm = tuple(perm)
    n = len(perm)
    p = 0
    while p < n and perm[p] == p:
        p += 1
    if p == n:
        return None                                   # identity
    q = perm[p]
    i = 0
    while p + i < n and perm[p + i] == q + i:
        i += 1
    r = q + i
    expected = (tuple(range(p)) + tuple(range(q, r))
                + tuple(range(p, q)) + tuple(range(r, n)))
    return (p, q, r) if perm == expected else None


def _round_down(x, m):
    return max(m, (x // m) * m)


def _compiler_params(num_grid_axes, in_block_bytes, out_block_bytes):
    # Default double-buffering on both sides; vmem_limit_bytes is derived from
    # the actual buffer plan so tile changes never trip the per-generation
    # scoped-VMEM defaults (16 MiB v5e, 32 MiB v6e/v7x) and stay well below
    # v7x's 64 MiB physical VMEM.
    # TODO(synk): give the strided-writeback output side deeper buffering
    # (Buffered(3)) once it is worth the extra VMEM on the target chip.
    plan = 2 * in_block_bytes + 2 * out_block_bytes
    vmem_limit = max(32 << 20, min(48 << 20, int(1.5 * plan) + (4 << 20)))
    return pltpu.CompilerParams(
        dimension_semantics=("parallel",) * num_grid_axes,
        vmem_limit_bytes=vmem_limit,
    )


# ----------------------------------------------------------------------------
# Kernels
# ----------------------------------------------------------------------------
def _transpose2d_kernel(x_ref, o_ref):
    # x_ref: (nb, ta, tb)   o_ref: (nb, tb, ta).  nb is a small static fold of
    # whole (a, b) slabs used to amortize per-grid-step overhead.
    for i in range(x_ref.shape[0]):                   # static unroll
        o_ref[i] = x_ref[i].T


def _suffix_swap_kernel(x_ref, o_ref):
    # x_ref: (ta, tb, ts)   o_ref: (tb, ta, ts).  The suffix axis ts stays
    # innermost on both sides, so every statement is a lane-dense (tb, ts)
    # slab copy (sublane-strided store, no lane transpose needed).
    for i in range(x_ref.shape[0]):                   # static unroll, ta <= 8
        o_ref[:, i, :] = x_ref[i]


# ----------------------------------------------------------------------------
# Pallas paths
# ----------------------------------------------------------------------------
def _transpose_2d(x3, *, tile=None):
    """(bp, a, b) -> (bp, b, a) batched, tiled transpose."""
    bp, a, b = x3.shape
    itemsize = jnp.dtype(x3.dtype).itemsize

    if tile is None:
        # 1024x1024 tiles (4 MiB at f32): long contiguous writeback rows and
        # few grid steps; the explicit vmem_limit below keeps this safe even
        # under v5e's 16 MiB default scoped-VMEM limit.
        tile = 1024
    ta = a if a <= tile else _round_down(tile, _LANE)
    tb = b if b <= tile else _round_down(tile, _LANE)

    # Fold several whole (a, b) slabs into one block when they are small, to
    # amortize the ~0.35 us fixed cost per grid step.
    nb = 1
    if a <= tile and b <= tile:
        nb = max(1, min(bp, 16, (tile * tile) // (a * b)))

    grid = (pl.cdiv(bp, nb), pl.cdiv(a, ta), pl.cdiv(b, tb))
    block_bytes = nb * ta * tb * itemsize

    return pl.pallas_call(
        _transpose2d_kernel,
        out_shape=jax.ShapeDtypeStruct((bp, b, a), x3.dtype),
        grid=grid,
        in_specs=[pl.BlockSpec((nb, ta, tb), lambda ib, ja, jb: (ib, ja, jb))],
        out_specs=pl.BlockSpec((nb, tb, ta), lambda ib, ja, jb: (ib, jb, ja)),
        compiler_params=_compiler_params(len(grid), block_bytes, block_bytes),
        cost_estimate=pl.CostEstimate(
            flops=0, transcendentals=0,
            bytes_accessed=2 * x3.size * itemsize),
    )(x3)


def _swap_with_suffix(x4, *, tile=None):
    """(bp, a, b, s) -> (bp, b, a, s); the suffix axis stays innermost."""
    bp, a, b, s = x4.shape
    itemsize = jnp.dtype(x4.dtype).itemsize

    if tile is None:
        tile = 1024
    budget = tile * tile                       # elements per block (~4 MiB f32)

    ts = s if s <= 2048 else 2048              # multiple of 128 when tiled
    ta = a if a <= _SUBLANE else _SUBLANE      # small: static unroll in kernel
    tb_cap = max(_SUBLANE, budget // max(1, ta * ts))
    tb = b if b <= tb_cap else _round_down(tb_cap, _SUBLANE)

    grid = (bp, pl.cdiv(a, ta), pl.cdiv(b, tb), pl.cdiv(s, ts))
    block_bytes = ta * tb * ts * itemsize

    return pl.pallas_call(
        _suffix_swap_kernel,
        out_shape=jax.ShapeDtypeStruct((bp, b, a, s), x4.dtype),
        grid=grid,
        in_specs=[pl.BlockSpec(
            (pl.Squeezed(), ta, tb, ts),
            lambda ib, ja, jb, js: (ib, ja, jb, js))],
        out_specs=pl.BlockSpec(
            (pl.Squeezed(), tb, ta, ts),
            lambda ib, ja, jb, js: (ib, jb, ja, js)),
        compiler_params=_compiler_params(len(grid), block_bytes, block_bytes),
        cost_estimate=pl.CostEstimate(
            flops=0, transcendentals=0,
            bytes_accessed=2 * x4.size * itemsize),
    )(x4)


# ----------------------------------------------------------------------------
# Public wrapper
# ----------------------------------------------------------------------------
def permute(x, dims, *, tile=None, min_bytes=256 * 1024):
    """Pallas TPU implementation of torch.Tensor.permute(*dims).

    tile:      override for the square tile of the 2-D transpose path.
    min_bytes: below this total size, dispatch + per-grid-step overhead
               exceed the HBM roofline, so we defer to jnp.transpose.
    """
    dims = tuple(int(d) for d in dims)
    n = x.ndim
    assert sorted(dims) == list(range(n)), "dims must be a permutation of the axes"
    out_shape = tuple(x.shape[d] for d in dims)

    # Identity: no data movement at all.
    if dims == tuple(range(n)):
        return x

    if x.size == 0:
        return jnp.transpose(x, dims)

    itemsize = jnp.dtype(x.dtype).itemsize
    total_bytes = x.size * itemsize

    gs = _grouped_swap(dims)
    if gs is None:
        # TODO(synk): fully general permutations need a composition of grouped
        # swaps; fall back to XLA for those rare cases.
        return jnp.transpose(x, dims)

    p, q, r = gs
    bp = math.prod(x.shape[:p])      # fixed leading prefix
    a = math.prod(x.shape[p:q])      # group A (moves right)
    b = math.prod(x.shape[q:r])      # group B (moves left)
    s = math.prod(x.shape[r:])       # fixed trailing suffix (stays innermost)

    # Moving a size-1 group is a free, layout-preserving reshape.
    if a == 1 or b == 1:
        return x.reshape(out_shape)

    # Tiny problems: kernel overhead dominates; XLA's transpose is the tool.
    if total_bytes < min_bytes:
        return jnp.transpose(x, dims)

    if s == 1:
        if min(a, b) * itemsize < 512:
            # Thin minor axis: masked stores / tiny strided bursts run at a
            # few % of HBM bandwidth; defer to XLA (per perf review).
            return jnp.transpose(x, dims)
        out3 = _transpose_2d(x.reshape(bp, a, b), tile=tile)
        return out3.reshape(out_shape)

    if s * itemsize < 128:
        # Suffix too narrow for lane-dense slab copies.
        return jnp.transpose(x, dims)
    out4 = _swap_with_suffix(x.reshape(bp, a, b, s), tile=tile)
    return out4.reshape(out_shape)


class Permute:
    """Mirror of the PyTorch nn.Module: Permute(*dims)(x) == x.permute(*dims)."""

    def __init__(self, *permute_dims):
        self.dims = permute_dims

    def __call__(self, x):
        return permute(x, self.dims)


# ----------------------------------------------------------------------------
# Demo / self-test
# ----------------------------------------------------------------------------
if __name__ == "__main__":
    key = jax.random.PRNGKey(0)

    f32, bf16 = jnp.float32, jnp.bfloat16
    cases = [
        # shape               dims           dtype  kwargs
        ((2, 4, 16, 16),     (0, 2, 3, 1),   f32,  {}),   # NCHW->NHWC, C=4: thin axis -> XLA fallback
        ((2, 4, 16, 16),     (0, 3, 1, 2),   f32,  {}),   # thin the other way -> XLA fallback
        ((2, 4, 16, 16),     (0, 1, 2, 3),   f32,  {}),   # identity: returns x unchanged
        ((2, 4, 16, 16),     (2, 0, 3, 1),   f32,  {}),   # non-grouped permutation -> XLA fallback
        ((2, 256, 16, 16),   (0, 2, 3, 1),   f32,  {}),   # 2-D kernel, whole-slab blocks, batch fold nb=2
        ((1, 520, 392),      (0, 2, 1),      f32,  {"tile": 256}),  # 2-D kernel, multi-tile, ragged edges
        ((2, 3, 136, 264),   (0, 1, 3, 2),   f32,  {}),   # 2-D kernel, bp=6 folded into a single block
        ((2, 512, 16, 16),   (0, 2, 3, 1),   bf16, {}),   # 2-D kernel, bf16
        ((2, 8, 128, 64),    (0, 2, 1, 3),   f32,  {}),   # suffix kernel: (B,H,S,D) -> (B,S,H,D)
        ((2, 13, 100, 96),   (0, 2, 1, 3),   f32,  {}),   # suffix kernel, ragged ta edge block
    ]

    for i, (shape, dims, dtype, kwargs) in enumerate(cases):
        k = jax.random.fold_in(key, i)
        x = jax.random.normal(k, shape, dtype=jnp.float32).astype(dtype)
        out = jax.block_until_ready(permute(x, dims, **kwargs))
        ref = jnp.transpose(x, dims)
        assert out.shape == ref.shape, (shape, dims, out.shape, ref.shape)
        assert out.dtype == ref.dtype, (shape, dims, out.dtype, ref.dtype)
        assert bool(jnp.array_equal(out, ref)), f"Pallas permute mismatch for {shape} {dims}"

    # Module-style usage matching the PyTorch spec.
    mod = Permute(0, 2, 3, 1)
    x = jax.random.normal(key, (2, 4, 16, 16), dtype=jnp.float32)
    assert bool(jnp.array_equal(jax.block_until_ready(mod(x)),
                                jnp.transpose(x, (0, 2, 3, 1))))

    print("KERNEL_OK")
</pallas_src>

<mosaic_0001>
module attributes {stable_mosaic.version = 11 : i64} {
  func.func @_transpose2d_kernel(%arg0: i32, %arg1: i32, %arg2: i32, %arg3: memref<2x256x256xf32, #tpu.memory_space<vmem>>, %arg4: memref<2x256x256xf32, #tpu.memory_space<vmem>>) attributes {dimension_semantics = [#tpu.dimension_semantics<parallel>, #tpu.dimension_semantics<parallel>, #tpu.dimension_semantics<parallel>], iteration_bounds = array<i64: 1, 1, 1>, scalar_prefetch = 0 : i64, scratch_operands = 0 : i64, tpu.core_type = #tpu.core_type<tc>, window_params = [{transform_indices = @transform_0, window_bounds = array<i64: 2, 256, 256>}, {transform_indices = @transform_1, window_bounds = array<i64: 2, 256, 256>}]} {
    %c0 = arith.constant 0 : index
    %c0_0 = arith.constant 0 : index
    %c0_1 = arith.constant 0 : index
    %0 = vector.load %arg3[%c0, %c0_0, %c0_1] : memref<2x256x256xf32, #tpu.memory_space<vmem>>, vector<1x256x256xf32>
    %1 = vector.shape_cast %0 : vector<1x256x256xf32> to vector<256x256xf32>
    %2 = tpu.transpose %1, [1, 0] : vector<256x256xf32> -> vector<256x256xf32>
    %c0_2 = arith.constant 0 : index
    %c0_3 = arith.constant 0 : index
    %c0_4 = arith.constant 0 : index
    %3 = vector.load %arg4[%c0_2, %c0_3, %c0_4] : memref<2x256x256xf32, #tpu.memory_space<vmem>>, vector<1x256x256xf32>
    %4 = vector.shape_cast %3 : vector<1x256x256xf32> to vector<256x256xf32>
    %5 = vector.shape_cast %2 : vector<256x256xf32> to vector<1x256x256xf32>
    tpu.vector_store %arg4[%c0_2, %c0_3, %c0_4], %5 {strides = array<i32>} : memref<2x256x256xf32, #tpu.memory_space<vmem>>, vector<1x256x256xf32>,
    %c1 = arith.constant 1 : index
    %c0_5 = arith.constant 0 : index
    %c0_6 = arith.constant 0 : index
    %6 = vector.load %arg3[%c1, %c0_5, %c0_6] : memref<2x256x256xf32, #tpu.memory_space<vmem>>, vector<1x256x256xf32>
    %7 = vector.shape_cast %6 : vector<1x256x256xf32> to vector<256x256xf32>
    %8 = tpu.transpose %7, [1, 0] : vector<256x256xf32> -> vector<256x256xf32>
    %c1_7 = arith.constant 1 : index
    %c0_8 = arith.constant 0 : index
    %c0_9 = arith.constant 0 : index
    %9 = vector.load %arg4[%c1_7, %c0_8, %c0_9] : memref<2x256x256xf32, #tpu.memory_space<vmem>>, vector<1x256x256xf32>
    %10 = vector.shape_cast %9 : vector<1x256x256xf32> to vector<256x256xf32>
    %11 = vector.shape_cast %8 : vector<256x256xf32> to vector<1x256x256xf32>
    tpu.vector_store %arg4[%c1_7, %c0_8, %c0_9], %11 {strides = array<i32>} : memref<2x256x256xf32, #tpu.memory_space<vmem>>, vector<1x256x256xf32>,
    return
  }
  func.func @transform_0(%arg0: i32, %arg1: i32, %arg2: i32) -> (i32, i32, i32) {
    %c0_i32 = arith.constant 0 : i32
    return %arg0, %arg1, %arg2 : i32, i32, i32
  }
  func.func @transform_1(%arg0: i32, %arg1: i32, %arg2: i32) -> (i32, i32, i32) {
    %c0_i32 = arith.constant 0 : i32
    return %arg0, %arg2, %arg1 : i32, i32, i32
  }
}

</mosaic_0001>

<llo_original>
// kernel: tpu_custom_call.1
$region0: #{tpu_custom_call.1}
  #allocation0 [shape = 'u32[]', space=smem, size = 0x4, offset = 0x4, fixed_abs, tag = 'smem constant byte address 0x4 - core index']
  #allocation1 [shape = 'u32[144,128]{1,0:T(1,128)}', space=vmem, size = 0x12000, scoped, tag = 'internal scratch']
  %s0 = inlined_call_operand.hbm [shape: f32[2,256,256], index: 0, kind: input, shape index: {}]
  %s1 = inlined_call_operand.hbm [shape: f32[2,256,256], index: 1, kind: output, shape index: {}]
  %s2 = sld [smem:[#allocation0]]
  $region18: #{tpu_custom_call.1} parent=0
    _
  %s4 = ssub.s32 1, %s2
  %s5 = scalar_select 0, %s4, %s2
  $region1: #{tpu_custom_call.1} parent=0
    #allocation2 [shape = 'u8[524288]{0}', space=vmem, size = 0x80000, scoped, tag = 'input window, operand 0, single buffered']
    #allocation3 [shape = 's32[1]{0}', space=sflag, size = 0x4, scoped, tag = 'scoped memory for tpu_custom_call.1']
    #allocation4 [shape = 's32[1]{0}', space=sflag, size = 0x4, scoped, tag = 'scoped memory for tpu_custom_call.1']
    #allocation5 [shape = 'u8[524288]{0}', space=vmem, size = 0x80000, scoped, tag = 'output window, operand 0, single buffered']
    %6 = vsyncpa [#allocation3], 0
    %7 = vsyncpa [#allocation4], 0
    // Predicated region
    $region2: #{tpu_custom_call.1} parent=1 // pred_check
      _
    $region3: #{tpu_custom_call.1} parent=1 // pred_check_branch
      %9 = sbr.rel (0) target = $region5
    $region4: #{tpu_custom_call.1} parent=1 // pred_region
      %s11 = ssub.s32 16384, 16384
      %12 = vsyncadd [#allocation3], %s11
      %s13 = sshll.u32 [#allocation2], 4
      %s14 = int_to_ptr.vmem [resolvable:$true] %s13
      %19 = dma.hbm_to_vmem [thread:$0]  %s0, 16384, %s14, [#allocation3], 256, 256, 16
    $region5: #{tpu_custom_call.1} parent=1 // pred_fallthru
      _
    // Predicated region
    $region6: #{tpu_custom_call.1} parent=1 // pred_check
      _
    $region7: #{tpu_custom_call.1} parent=1 // pred_check_branch
      %21 = sbr.rel (0) target = $region9
    $region8: #{tpu_custom_call.1} parent=1 // pred_region
      %22 = dma.done [#allocation3], 16384
    $region9: #{tpu_custom_call.1} parent=1 // pred_fallthru
      _
    %v23 = vld [vmem:[#allocation2] sm:$0xff]
    %v24 = vld [vmem:[#allocation2 + $0x8] sm:$0xff]
    %v25 = vld [vmem:[#allocation2 + $0x10] sm:$0xff]
    %v26 = vld [vmem:[#allocation2 + $0x18] sm:$0xff]
    %v27 = vld [vmem:[#allocation2 + $0x20] sm:$0xff]
    %v28 = vld [vmem:[#allocation2 + $0x28] sm:$0xff]
    %v29 = vld [vmem:[#allocation2 + $0x30] sm:$0xff]
    %v30 = vld [vmem:[#allocation2 + $0x38] sm:$0xff]
    %v31 = vld [vmem:[#allocation2 + $0x40] sm:$0xff]
    %v32 = vld [vmem:[#allocation2 + $0x48] sm:$0xff]
    %v33 = vld [vmem:[#allocation2 + $0x50] sm:$0xff]
    %v34 = vld [vmem:[#allocation2 + $0x58] sm:$0xff]
    %v35 = vld [vmem:[#allocation2 + $0x60] sm:$0xff]
    %v36 = vld [vmem:[#allocation2 + $0x68] sm:$0xff]
    %v37 = vld [vmem:[#allocation2 + $0x70] sm:$0xff]
    %v38 = vld [vmem:[#allocation2 + $0x78] sm:$0xff]
    %v39 = vld [vmem:[#allocation2 + $0x80] sm:$0xff]
    %v40 = vld [vmem:[#allocation2 + $0x88] sm:$0xff]
    %v41 = vld [vmem:[#allocation2 + $0x90] sm:$0xff]
    %v42 = vld [vmem:[#allocation2 + $0x98] sm:$0xff]
    %v43 = vld [vmem:[#allocation2 + $0xa0] sm:$0xff]
    %v44 = vld [vmem:[#allocation2 + $0xa8] sm:$0xff]
    %v45 = vld [vmem:[#allocation2 + $0xb0] sm:$0xff]
    %v46 = vld [vmem:[#allocation2 + $0xb8] sm:$0xff]
    %v47 = vld [vmem:[#allocation2 + $0xc0] sm:$0xff]
    %v48 = vld [vmem:[#allocation2 + $0xc8] sm:$0xff]
    %v49 = vld [vmem:[#allocation2 + $0xd0] sm:$0xff]
    %v50 = vld [vmem:[#allocation2 + $0xd8] sm:$0xff]
    %v51 = vld [vmem:[#allocation2 + $0xe0] sm:$0xff]
    %v52 = vld [vmem:[#allocation2 + $0xe8] sm:$0xff]
    %v53 = vld [vmem:[#allocation2 + $0xf0] sm:$0xff]
    %v54 = vld [vmem:[#allocation2 + $0xf8] sm:$0xff]
    %v55 = vld [vmem:[#allocation2 + $0x100] sm:$0xff]
    %v56 = vld [vmem:[#allocation2 + $0x108] sm:$0xff]
    %v57 = vld [vmem:[#allocation2 + $0x110] sm:$0xff]
    %v58 = vld [vmem:[#allocation2 + $0x118] sm:$0xff]
    %v59 = vld [vmem:[#allocation2 + $0x120] sm:$0xff]
    %v60 = vld [vmem:[#allocation2 + $0x128] sm:$0xff]
    %v61 = vld [vmem:[#allocation2 + $0x130] sm:$0xff]
    %v62 = vld [vmem:[#allocation2 + $0x138] sm:$0xff]
    %v63 = vld [vmem:[#allocation2 + $0x140] sm:$0xff]
    %v64 = vld [vmem:[#allocation2 + $0x148] sm:$0xff]
    %v65 = vld [vmem:[#allocation2 + $0x150] sm:$0xff]
    %v66 = vld [vmem:[#allocation2 + $0x158] sm:$0xff]
    %v67 = vld [vmem:[#allocation2 + $0x160] sm:$0xff]
    %v68 = vld [vmem:[#allocation2 + $0x168] sm:$0xff]
    %v69 = vld [vmem:[#allocation2 + $0x170] sm:$0xff]
    %v70 = vld [vmem:[#allocation2 + $0x178] sm:$0xff]
    %v71 = vld [vmem:[#allocation2 + $0x180] sm:$0xff]
    %v72 = vld [vmem:[#allocation2 + $0x188] sm:$0xff]
    %v73 = vld [vmem:[#allocation2 + $0x190] sm:$0xff]
    %v74 = vld [vmem:[#allocation2 + $0x198] sm:$0xff]
    %v75 = vld [vmem:[#allocation2 + $0x1a0] sm:$0xff]
    %v76 = vld [vmem:[#allocation2 + $0x1a8] sm:$0xff]
    %v77 = vld [vmem:[#allocation2 + $0x1b0] sm:$0xff]
    %v78 = vld [vmem:[#allocation2 + $0x1b8] sm:$0xff]
    %v79 = vld [vmem:[#allocation2 + $0x1c0] sm:$0xff]
    %v80 = vld [vmem:[#allocation2 + $0x1c8] sm:$0xff]
    %v81 = vld [vmem:[#allocation2 + $0x1d0] sm:$0xff]
    %v82 = vld [vmem:[#allocation2 + $0x1d8] sm:$0xff]
    %v83 = vld [vmem:[#allocation2 + $0x1e0] sm:$0xff]
    %v84 = vld [vmem:[#allocation2 + $0x1e8] sm:$0xff]
    %v85 = vld [vmem:[#allocation2 + $0x1f0] sm:$0xff]
    %v86 = vld [vmem:[#allocation2 + $0x1f8] sm:$0xff]
    %87 = vxpose.xlu0.b32.start [1/16] %v23, 128
    %88 = vxpose.xlu0.b32.cont [2/16] %v25, 128
    %89 = vxpose.xlu0.b32.cont [3/16] %v27, 128
    %90 = vxpose.xlu0.b32.cont [4/16] %v29, 128
    %91 = vxpose.xlu0.b32.cont [5/16] %v31, 128
    %92 = vxpose.xlu0.b32.cont [6/16] %v33, 128
    %93 = vxpose.xlu0.b32.cont [7/16] %v35, 128
    %94 = vxpose.xlu0.b32.cont [8/16] %v37, 128
    %95 = vxpose.xlu0.b32.cont [9/16] %v39, 128
    %96 = vxpose.xlu0.b32.cont [10/16] %v41, 128
    %97 = vxpose.xlu0.b32.cont [11/16] %v43, 128
    %98 = vxpose.xlu0.b32.cont [12/16] %v45, 128
    %99 = vxpose.xlu0.b32.cont [13/16] %v47, 128
    %100 = vxpose.xlu0.b32.cont [14/16] %v49, 128
    %101 = vxpose.xlu0.b32.cont [15/16] %v51, 128
    %102 = vxpose.xlu0.b32.end [16/16] %v53, 128
    %v103 = vpop.trf.xlu0
    %v104 = vpop.trf.xlu0
    %v105 = vpop.trf.xlu0
    %v106 = vpop.trf.xlu0
    %v107 = vpop.trf.xlu0
    %v108 = vpop.trf.xlu0
    %v109 = vpop.trf.xlu0
    %v110 = vpop.trf.xlu0
    %v111 = vpop.trf.xlu0
    %v112 = vpop.trf.xlu0
    %v113 = vpop.trf.xlu0
    %v114 = vpop.trf.xlu0
    %v115 = vpop.trf.xlu0
    %v116 = vpop.trf.xlu0
    %v117 = vpop.trf.xlu0
    %v118 = vpop.trf.xlu0
    %119 = vxpose.xlu0.b32.start [1/16] %v24, 128
    %120 = vxpose.xlu0.b32.cont [2/16] %v26, 128
    %121 = vxpose.xlu0.b32.cont [3/16] %v28, 128
    %122 = vxpose.xlu0.b32.cont [4/16] %v30, 128
    %123 = vxpose.xlu0.b32.cont [5/16] %v32, 128
    %124 = vxpose.xlu0.b32.cont [6/16] %v34, 128
    %125 = vxpose.xlu0.b32.cont [7/16] %v36, 128
    %126 = vxpose.xlu0.b32.cont [8/16] %v38, 128
    %127 = vxpose.xlu0.b32.cont [9/16] %v40, 128
    %128 = vxpose.xlu0.b32.cont [10/16] %v42, 128
    %129 = vxpose.xlu0.b32.cont [11/16] %v44, 128
    %130 = vxpose.xlu0.b32.cont [12/16] %v46, 128
    %131 = vxpose.xlu0.b32.cont [13/16] %v48, 128
    %132 = vxpose.xlu0.b32.cont [14/16] %v50, 128
    %133 = vxpose.xlu0.b32.cont [15/16] %v52, 128
    %134 = vxpose.xlu0.b32.end [16/16] %v54, 128
    %v135 = vpop.trf.xlu0
    %v136 = vpop.trf.xlu0
    %v137 = vpop.trf.xlu0
    %v138 = vpop.trf.xlu0
    %v139 = vpop.trf.xlu0
    %v140 = vpop.trf.xlu0
    %v141 = vpop.trf.xlu0
    %v142 = vpop.trf.xlu0
    %v143 = vpop.trf.xlu0
    %v144 = vpop.trf.xlu0
    %v145 = vpop.trf.xlu0
    %v146 = vpop.trf.xlu0
    %v147 = vpop.trf.xlu0
    %v148 = vpop.trf.xlu0
    %v149 = vpop.trf.xlu0
    %v150 = vpop.trf.xlu0
    %151 = vxpose.xlu0.b32.start [1/16] %v55, 128
    %152 = vxpose.xlu0.b32.cont [2/16] %v57, 128
    %153 = vxpose.xlu0.b32.cont [3/16] %v59, 128
    %154 = vxpose.xlu0.b32.cont [4/16] %v61, 128
    %155 = vxpose.xlu0.b32.cont [5/16] %v63, 128
    %156 = vxpose.xlu0.b32.cont [6/16] %v65, 128
    %157 = vxpose.xlu0.b32.cont [7/16] %v67, 128
    %158 = vxpose.xlu0.b32.cont [8/16] %v69, 128
    %159 = vxpose.xlu0.b32.cont [9/16] %v71, 128
    %160 = vxpose.xlu0.b32.cont [10/16] %v73, 128
    %161 = vxpose.xlu0.b32.cont [11/16] %v75, 128
    %162 = vxpose.xlu0.b32.cont [12/16] %v77, 128
    %163 = vxpose.xlu0.b32.cont [13/16] %v79, 128
    %164 = vxpose.xlu0.b32.cont [14/16] %v81, 128
    %165 = vxpose.xlu0.b32.cont [15/16] %v83, 128
    %166 = vxpose.xlu0.b32.end [16/16] %v85, 128
    %v167 = vpop.trf.xlu0
    %v168 = vpop.trf.xlu0
    %v169 = vpop.trf.xlu0
    %v170 = vpop.trf.xlu0
    %v171 = vpop.trf.xlu0
    %v172 = vpop.trf.xlu0
    %v173 = vpop.trf.xlu0
    %v174 = vpop.trf.xlu0
    %v175 = vpop.trf.xlu0
    %v176 = vpop.trf.xlu0
    %v177 = vpop.trf.xlu0
    %v178 = vpop.trf.xlu0
    %v179 = vpop.trf.xlu0
    %v180 = vpop.trf.xlu0
    %v181 = vpop.trf.xlu0
    %v182 = vpop.trf.xlu0
    %183 = vxpose.xlu0.b32.start [1/16] %v56, 128
    %184 = vxpose.xlu0.b32.cont [2/16] %v58, 128
    %185 = vxpose.xlu0.b32.cont [3/16] %v60, 128
    %186 = vxpose.xlu0.b32.cont [4/16] %v62, 128
    %187 = vxpose.xlu0.b32.cont [5/16] %v64, 128
    %188 = vxpose.xlu0.b32.cont [6/16] %v66, 128
    %189 = vxpose.xlu0.b32.cont [7/16] %v68, 128
    %190 = vxpose.xlu0.b32.cont [8/16] %v70, 128
    %191 = vxpose.xlu0.b32.cont [9/16] %v72, 128
    %192 = vxpose.xlu0.b32.cont [10/16] %v74, 128
    %193 = vxpose.xlu0.b32.cont [11/16] %v76, 128
    %194 = vxpose.xlu0.b32.cont [12/16] %v78, 128
    %195 = vxpose.xlu0.b32.cont [13/16] %v80, 128
    %196 = vxpose.xlu0.b32.cont [14/16] %v82, 128
    %197 = vxpose.xlu0.b32.cont [15/16] %v84, 128
    %198 = vxpose.xlu0.b32.end [16/16] %v86, 128
    %v199 = vpop.trf.xlu0
    %v200 = vpop.trf.xlu0
    %v201 = vpop.trf.xlu0
    %v202 = vpop.trf.xlu0
    %v203 = vpop.trf.xlu0
    %v204 = vpop.trf.xlu0
    %v205 = vpop.trf.xlu0
    %v206 = vpop.trf.xlu0
    %v207 = vpop.trf.xlu0
    %v208 = vpop.trf.xlu0
    %v209 = vpop.trf.xlu0
    %v210 = vpop.trf.xlu0
    %v211 = vpop.trf.xlu0
    %v212 = vpop.trf.xlu0
    %v213 = vpop.trf.xlu0
    %v214 = vpop.trf.xlu0
    %215 = vst [vmem:[#allocation5] sm:$0xff] %v103
    %216 = vst [vmem:[#allocation5 + $0x8] sm:$0xff] %v167
    %217 = vst [vmem:[#allocation5 + $0x10] sm:$0xff] %v104
    %218 = vst [vmem:[#allocation5 + $0x18] sm:$0xff] %v168
    %219 = vst [vmem:[#allocation5 + $0x20] sm:$0xff] %v105
    %220 = vst [vmem:[#allocation5 + $0x28] sm:$0xff] %v169
    %221 = vst [vmem:[#allocation5 + $0x30] sm:$0xff] %v106
    %222 = vst [vmem:[#allocation5 + $0x38] sm:$0xff] %v170
    %223 = vst [vmem:[#allocation5 + $0x40] sm:$0xff] %v107
    %224 = vst [vmem:[#allocation5 + $0x48] sm:$0xff] %v171
    %225 = vst [vmem:[#allocation5 + $0x50] sm:$0xff] %v108
    %226 = vst [vmem:[#allocation5 + $0x58] sm:$0xff] %v172
    %227 = vst [vmem:[#allocation5 + $0x60] sm:$0xff] %v109
    %228 = vst [vmem:[#allocation5 + $0x68] sm:$0xff] %v173
    %229 = vst [vmem:[#allocation5 + $0x70] sm:$0xff] %v110
    %230 = vst [vmem:[#allocation5 + $0x78] sm:$0xff] %v174
    %231 = vst [vmem:[#allocation5 + $0x80] sm:$0xff] %v111
    %232 = vst [vmem:[#allocation5 + $0x88] sm:$0xff] %v175
    %233 = vst [vmem:[#allocation5 + $0x90] sm:$0xff] %v112
    %234 = vst [vmem:[#allocation5 + $0x98] sm:$0xff] %v176
    %235 = vst [vmem:[#allocation5 + $0xa0] sm:$0xff] %v113
    %236 = vst [vmem:[#allocation5 + $0xa8] sm:$0xff] %v177
    %237 = vst [vmem:[#allocation5 + $0xb0] sm:$0xff] %v114
    %238 = vst [vmem:[#allocation5 + $0xb8] sm:$0xff] %v178
    %239 = vst [vmem:[#allocation5 + $0xc0] sm:$0xff] %v115
    %240 = vst [vmem:[#allocation5 + $0xc8] sm:$0xff] %v179
    %241 = vst [vmem:[#allocation5 + $0xd0] sm:$0xff] %v116
    %242 = vst [vmem:[#allocation5 + $0xd8] sm:$0xff] %v180
    %243 = vst [vmem:[#allocation5 + $0xe0] sm:$0xff] %v117
    %244 = vst [vmem:[#allocation5 + $0xe8] sm:$0xff] %v181
    %245 = vst [vmem:[#allocation5 + $0xf0] sm:$0xff] %v118
    %246 = vst [vmem:[#allocation5 + $0xf8] sm:$0xff] %v182
    %247 = vst [vmem:[#allocation5 + $0x100] sm:$0xff] %v135
    %248 = vst [vmem:[#allocation5 + $0x108] sm:$0xff] %v199
    %249 = vst [vmem:[#allocation5 + $0x110] sm:$0xff] %v136
    %250 = vst [vmem:[#allocation5 + $0x118] sm:$0xff] %v200
    %251 = vst [vmem:[#allocation5 + $0x120] sm:$0xff] %v137
    %252 = vst [vmem:[#allocation5 + $0x128] sm:$0xff] %v201
    %253 = vst [vmem:[#allocation5 + $0x130] sm:$0xff] %v138
    %254 = vst [vmem:[#allocation5 + $0x138] sm:$0xff] %v202
    %255 = vst [vmem:[#allocation5 + $0x140] sm:$0xff] %v139
    %256 = vst [vmem:[#allocation5 + $0x148] sm:$0xff] %v203
    %257 = vst [vmem:[#allocation5 + $0x150] sm:$0xff] %v140
    %258 = vst [vmem:[#allocation5 + $0x158] sm:$0xff] %v204
    %259 = vst [vmem:[#allocation5 + $0x160] sm:$0xff] %v141
    %260 = vst [vmem:[#allocation5 + $0x168] sm:$0xff] %v205
    %261 = vst [vmem:[#allocation5 + $0x170] sm:$0xff] %v142
    %262 = vst [vmem:[#allocation5 + $0x178] sm:$0xff] %v206
    %263 = vst [vmem:[#allocation5 + $0x180] sm:$0xff] %v143
    %264 = vst [vmem:[#allocation5 + $0x188] sm:$0xff] %v207
    %265 = vst [vmem:[#allocation5 + $0x190] sm:$0xff] %v144
    %266 = vst [vmem:[#allocation5 + $0x198] sm:$0xff] %v208
    %267 = vst [vmem:[#allocation5 + $0x1a0] sm:$0xff] %v145
    %268 = vst [vmem:[#allocation5 + $0x1a8] sm:$0xff] %v209
    %269 = vst [vmem:[#allocation5 + $0x1b0] sm:$0xff] %v146
    %270 = vst [vmem:[#allocation5 + $0x1b8] sm:$0xff] %v210
    %271 = vst [vmem:[#allocation5 + $0x1c0] sm:$0xff] %v147
    %272 = vst [vmem:[#allocation5 + $0x1c8] sm:$0xff] %v211
    %273 = vst [vmem:[#allocation5 + $0x1d0] sm:$0xff] %v148
    %274 = vst [vmem:[#allocation5 + $0x1d8] sm:$0xff] %v212
    %275 = vst [vmem:[#allocation5 + $0x1e0] sm:$0xff] %v149
    %276 = vst [vmem:[#allocation5 + $0x1e8] sm:$0xff] %v213
    %277 = vst [vmem:[#allocation5 + $0x1f0] sm:$0xff] %v150
    %278 = vst [vmem:[#allocation5 + $0x1f8] sm:$0xff] %v214
    %s279 = scalar_lea.vmem [#allocation2], 512
    %v280 = vld [vmem:[%s279] sm:$0xff]
    %v281 = vld [vmem:[%s279 + $0x8] sm:$0xff]
    %v282 = vld [vmem:[%s279 + $0x10] sm:$0xff]
    %v283 = vld [vmem:[%s279 + $0x18] sm:$0xff]
    %v284 = vld [vmem:[%s279 + $0x20] sm:$0xff]
    %v285 = vld [vmem:[%s279 + $0x28] sm:$0xff]
    %v286 = vld [vmem:[%s279 + $0x30] sm:$0xff]
    %v287 = vld [vmem:[%s279 + $0x38] sm:$0xff]
    %v288 = vld [vmem:[%s279 + $0x40] sm:$0xff]
    %v289 = vld [vmem:[%s279 + $0x48] sm:$0xff]
    %v290 = vld [vmem:[%s279 + $0x50] sm:$0xff]
    %v291 = vld [vmem:[%s279 + $0x58] sm:$0xff]
    %v292 = vld [vmem:[%s279 + $0x60] sm:$0xff]
    %v293 = vld [vmem:[%s279 + $0x68] sm:$0xff]
    %v294 = vld [vmem:[%s279 + $0x70] sm:$0xff]
    %v295 = vld [vmem:[%s279 + $0x78] sm:$0xff]
    %v296 = vld [vmem:[%s279 + $0x80] sm:$0xff]
    %v297 = vld [vmem:[%s279 + $0x88] sm:$0xff]
    %v298 = vld [vmem:[%s279 + $0x90] sm:$0xff]
    %v299 = vld [vmem:[%s279 + $0x98] sm:$0xff]
    %v300 = vld [vmem:[%s279 + $0xa0] sm:$0xff]
    %v301 = vld [vmem:[%s279 + $0xa8] sm:$0xff]
    %v302 = vld [vmem:[%s279 + $0xb0] sm:$0xff]
    %v303 = vld [vmem:[%s279 + $0xb8] sm:$0xff]
    %v304 = vld [vmem:[%s279 + $0xc0] sm:$0xff]
    %v305 = vld [vmem:[%s279 + $0xc8] sm:$0xff]
    %v306 = vld [vmem:[%s279 + $0xd0] sm:$0xff]
    %v307 = vld [vmem:[%s279 + $0xd8] sm:$0xff]
    %v308 = vld [vmem:[%s279 + $0xe0] sm:$0xff]
    %v309 = vld [vmem:[%s279 + $0xe8] sm:$0xff]
    %v310 = vld [vmem:[%s279 + $0xf0] sm:$0xff]
    %v311 = vld [vmem:[%s279 + $0xf8] sm:$0xff]
    %v312 = vld [vmem:[%s279 + $0x100] sm:$0xff]
    %v313 = vld [vmem:[%s279 + $0x108] sm:$0xff]
    %v314 = vld [vmem:[%s279 + $0x110] sm:$0xff]
    %v315 = vld [vmem:[%s279 + $0x118] sm:$0xff]
    %v316 = vld [vmem:[%s279 + $0x120] sm:$0xff]
    %v317 = vld [vmem:[%s279 + $0x128] sm:$0xff]
    %v318 = vld [vmem:[%s279 + $0x130] sm:$0xff]
    %v319 = vld [vmem:[%s279 + $0x138] sm:$0xff]
    %v320 = vld [vmem:[%s279 + $0x140] sm:$0xff]
    %v321 = vld [vmem:[%s279 + $0x148] sm:$0xff]
    %v322 = vld [vmem:[%s279 + $0x150] sm:$0xff]
    %v323 = vld [vmem:[%s279 + $0x158] sm:$0xff]
    %v324 = vld [vmem:[%s279 + $0x160] sm:$0xff]
    %v325 = vld [vmem:[%s279 + $0x168] sm:$0xff]
    %v326 = vld [vmem:[%s279 + $0x170] sm:$0xff]
    %v327 = vld [vmem:[%s279 + $0x178] sm:$0xff]
    %v328 = vld [vmem:[%s279 + $0x180] sm:$0xff]
    %v329 = vld [vmem:[%s279 + $0x188] sm:$0xff]
    %v330 = vld [vmem:[%s279 + $0x190] sm:$0xff]
    %v331 = vld [vmem:[%s279 + $0x198] sm:$0xff]
    %v332 = vld [vmem:[%s279 + $0x1a0] sm:$0xff]
    %v333 = vld [vmem:[%s279 + $0x1a8] sm:$0xff]
    %v334 = vld [vmem:[%s279 + $0x1b0] sm:$0xff]
    %v335 = vld [vmem:[%s279 + $0x1b8] sm:$0xff]
    %v336 = vld [vmem:[%s279 + $0x1c0] sm:$0xff]
    %v337 = vld [vmem:[%s279 + $0x1c8] sm:$0xff]
    %v338 = vld [vmem:[%s279 + $0x1d0] sm:$0xff]
    %v339 = vld [vmem:[%s279 + $0x1d8] sm:$0xff]
    %v340 = vld [vmem:[%s279 + $0x1e0] sm:$0xff]
    %v341 = vld [vmem:[%s279 + $0x1e8] sm:$0xff]
    %v342 = vld [vmem:[%s279 + $0x1f0] sm:$0xff]
    %v343 = vld [vmem:[%s279 + $0x1f8] sm:$0xff]
    %344 = vxpose.xlu0.b32.start [1/16] %v280, 128
    %345 = vxpose.xlu0.b32.cont [2/16] %v282, 128
    %346 = vxpose.xlu0.b32.cont [3/16] %v284, 128
    %347 = vxpose.xlu0.b32.cont [4/16] %v286, 128
    %348 = vxpose.xlu0.b32.cont [5/16] %v288, 128
    %349 = vxpose.xlu0.b32.cont [6/16] %v290, 128
    %350 = vxpose.xlu0.b32.cont [7/16] %v292, 128
    %351 = vxpose.xlu0.b32.cont [8/16] %v294, 128
    %352 = vxpose.xlu0.b32.cont [9/16] %v296, 128
    %353 = vxpose.xlu0.b32.cont [10/16] %v298, 128
    %354 = vxpose.xlu0.b32.cont [11/16] %v300, 128
    %355 = vxpose.xlu0.b32.cont [12/16] %v302, 128
    %356 = vxpose.xlu0.b32.cont [13/16] %v304, 128
    %357 = vxpose.xlu0.b32.cont [14/16] %v306, 128
    %358 = vxpose.xlu0.b32.cont [15/16] %v308, 128
    %359 = vxpose.xlu0.b32.end [16/16] %v310, 128
    %v360 = vpop.trf.xlu0
    %v361 = vpop.trf.xlu0
    %v362 = vpop.trf.xlu0
    %v363 = vpop.trf.xlu0
    %v364 = vpop.trf.xlu0
    %v365 = vpop.trf.xlu0
    %v366 = vpop.trf.xlu0
    %v367 = vpop.trf.xlu0
    %v368 = vpop.trf.xlu0
    %v369 = vpop.trf.xlu0
    %v370 = vpop.trf.xlu0
    %v371 = vpop.trf.xlu0
    %v372 = vpop.trf.xlu0
    %v373 = vpop.trf.xlu0
    %v374 = vpop.trf.xlu0
    %v375 = vpop.trf.xlu0
    %376 = vxpose.xlu0.b32.start [1/16] %v281, 128
    %377 = vxpose.xlu0.b32.cont [2/16] %v283, 128
    %378 = vxpose.xlu0.b32.cont [3/16] %v285, 128
    %379 = vxpose.xlu0.b32.cont [4/16] %v287, 128
    %380 = vxpose.xlu0.b32.cont [5/16] %v289, 128
    %381 = vxpose.xlu0.b32.cont [6/16] %v291, 128
    %382 = vxpose.xlu0.b32.cont [7/16] %v293, 128
    %383 = vxpose.xlu0.b32.cont [8/16] %v295, 128
    %384 = vxpose.xlu0.b32.cont [9/16] %v297, 128
    %385 = vxpose.xlu0.b32.cont [10/16] %v299, 128
    %386 = vxpose.xlu0.b32.cont [11/16] %v301, 128
    %387 = vxpose.xlu0.b32.cont [12/16] %v303, 128
    %388 = vxpose.xlu0.b32.cont [13/16] %v305, 128
    %389 = vxpose.xlu0.b32.cont [14/16] %v307, 128
    %390 = vxpose.xlu0.b32.cont [15/16] %v309, 128
    %391 = vxpose.xlu0.b32.end [16/16] %v311, 128
    %v392 = vpop.trf.xlu0
    %v393 = vpop.trf.xlu0
    %v394 = vpop.trf.xlu0
    %v395 = vpop.trf.xlu0
    %v396 = vpop.trf.xlu0
    %v397 = vpop.trf.xlu0
    %v398 = vpop.trf.xlu0
    %v399 = vpop.trf.xlu0
    %v400 = vpop.trf.xlu0
    %v401 = vpop.trf.xlu0
    %v402 = vpop.trf.xlu0
    %v403 = vpop.trf.xlu0
    %v404 = vpop.trf.xlu0
    %v405 = vpop.trf.xlu0
    %v406 = vpop.trf.xlu0
    %v407 = vpop.trf.xlu0
    %408 = vxpose.xlu0.b32.start [1/16] %v312, 128
    %409 = vxpose.xlu0.b32.cont [2/16] %v314, 128
    %410 = vxpose.xlu0.b32.cont [3/16] %v316, 128
    %411 = vxpose.xlu0.b32.cont [4/16] %v318, 128
    %412 = vxpose.xlu0.b32.cont [5/16] %v320, 128
    %413 = vxpose.xlu0.b32.cont [6/16] %v322, 128
    %414 = vxpose.xlu0.b32.cont [7/16] %v324, 128
    %415 = vxpose.xlu0.b32.cont [8/16] %v326, 128
    %416 = vxpose.xlu0.b32.cont [9/16] %v328, 128
    %417 = vxpose.xlu0.b32.cont [10/16] %v330, 128
    %418 = vxpose.xlu0.b32.cont [11/16] %v332, 128
    %419 = vxpose.xlu0.b32.cont [12/16] %v334, 128
    %420 = vxpose.xlu0.b32.cont [13/16] %v336, 128
    %421 = vxpose.xlu0.b32.cont [14/16] %v338, 128
    %422 = vxpose.xlu0.b32.cont [15/16] %v340, 128
    %423 = vxpose.xlu0.b32.end [16/16] %v342, 128
    %v424 = vpop.trf.xlu0
    %v425 = vpop.trf.xlu0
    %v426 = vpop.trf.xlu0
    %v427 = vpop.trf.xlu0
    %v428 = vpop.trf.xlu0
    %v429 = vpop.trf.xlu0
    %v430 = vpop.trf.xlu0
    %v431 = vpop.trf.xlu0
    %v432 = vpop.trf.xlu0
    %v433 = vpop.trf.xlu0
    %v434 = vpop.trf.xlu0
    %v435 = vpop.trf.xlu0
    %v436 = vpop.trf.xlu0
    %v437 = vpop.trf.xlu0
    %v438 = vpop.trf.xlu0
    %v439 = vpop.trf.xlu0
    %440 = vxpose.xlu0.b32.start [1/16] %v313, 128
    %441 = vxpose.xlu0.b32.cont [2/16] %v315, 128
    %442 = vxpose.xlu0.b32.cont [3/16] %v317, 128
    %443 = vxpose.xlu0.b32.cont [4/16] %v319, 128
    %444 = vxpose.xlu0.b32.cont [5/16] %v321, 128
    %445 = vxpose.xlu0.b32.cont [6/16] %v323, 128
    %446 = vxpose.xlu0.b32.cont [7/16] %v325, 128
    %447 = vxpose.xlu0.b32.cont [8/16] %v327, 128
    %448 = vxpose.xlu0.b32.cont [9/16] %v329, 128
    %449 = vxpose.xlu0.b32.cont [10/16] %v331, 128
    %450 = vxpose.xlu0.b32.cont [11/16] %v333, 128
    %451 = vxpose.xlu0.b32.cont [12/16] %v335, 128
    %452 = vxpose.xlu0.b32.cont [13/16] %v337, 128
    %453 = vxpose.xlu0.b32.cont [14/16] %v339, 128
    %454 = vxpose.xlu0.b32.cont [15/16] %v341, 128
    %455 = vxpose.xlu0.b32.end [16/16] %v343, 128
    %v456 = vpop.trf.xlu0
    %v457 = vpop.trf.xlu0
    %v458 = vpop.trf.xlu0
    %v459 = vpop.trf.xlu0
    %v460 = vpop.trf.xlu0
    %v461 = vpop.trf.xlu0
    %v462 = vpop.trf.xlu0
    %v463 = vpop.trf.xlu0
    %v464 = vpop.trf.xlu0
    %v465 = vpop.trf.xlu0
    %v466 = vpop.trf.xlu0
    %v467 = vpop.trf.xlu0
    %v468 = vpop.trf.xlu0
    %v469 = vpop.trf.xlu0
    %v470 = vpop.trf.xlu0
    %v471 = vpop.trf.xlu0
    %s472 = scalar_lea.vmem [#allocation5], 512
    %473 = vst [vmem:[%s472] sm:$0xff] %v360
    %474 = vst [vmem:[%s472 + $0x8] sm:$0xff] %v424
    %475 = vst [vmem:[%s472 + $0x10] sm:$0xff] %v361
    %476 = vst [vmem:[%s472 + $0x18] sm:$0xff] %v425
    %477 = vst [vmem:[%s472 + $0x20] sm:$0xff] %v362
    %478 = vst [vmem:[%s472 + $0x28] sm:$0xff] %v426
    %479 = vst [vmem:[%s472 + $0x30] sm:$0xff] %v363
    %480 = vst [vmem:[%s472 + $0x38] sm:$0xff] %v427
    %481 = vst [vmem:[%s472 + $0x40] sm:$0xff] %v364
    %482 = vst [vmem:[%s472 + $0x48] sm:$0xff] %v428
    %483 = vst [vmem:[%s472 + $0x50] sm:$0xff] %v365
    %484 = vst [vmem:[%s472 + $0x58] sm:$0xff] %v429
    %485 = vst [vmem:[%s472 + $0x60] sm:$0xff] %v366
    %486 = vst [vmem:[%s472 + $0x68] sm:$0xff] %v430
    %487 = vst [vmem:[%s472 + $0x70] sm:$0xff] %v367
    %488 = vst [vmem:[%s472 + $0x78] sm:$0xff] %v431
    %489 = vst [vmem:[%s472 + $0x80] sm:$0xff] %v368
    %490 = vst [vmem:[%s472 + $0x88] sm:$0xff] %v432
    %491 = vst [vmem:[%s472 + $0x90] sm:$0xff] %v369
    %492 = vst [vmem:[%s472 + $0x98] sm:$0xff] %v433
    %493 = vst [vmem:[%s472 + $0xa0] sm:$0xff] %v370
    %494 = vst [vmem:[%s472 + $0xa8] sm:$0xff] %v434
    %495 = vst [vmem:[%s472 + $0xb0] sm:$0xff] %v371
    %496 = vst [vmem:[%s472 + $0xb8] sm:$0xff] %v435
    %497 = vst [vmem:[%s472 + $0xc0] sm:$0xff] %v372
    %498 = vst [vmem:[%s472 + $0xc8] sm:$0xff] %v436
    %499 = vst [vmem:[%s472 + $0xd0] sm:$0xff] %v373
    %500 = vst [vmem:[%s472 + $0xd8] sm:$0xff] %v437
    %501 = vst [vmem:[%s472 + $0xe0] sm:$0xff] %v374
    %502 = vst [vmem:[%s472 + $0xe8] sm:$0xff] %v438
    %503 = vst [vmem:[%s472 + $0xf0] sm:$0xff] %v375
    %504 = vst [vmem:[%s472 + $0xf8] sm:$0xff] %v439
    %505 = vst [vmem:[%s472 + $0x100] sm:$0xff] %v392
    %506 = vst [vmem:[%s472 + $0x108] sm:$0xff] %v456
    %507 = vst [vmem:[%s472 + $0x110] sm:$0xff] %v393
    %508 = vst [vmem:[%s472 + $0x118] sm:$0xff] %v457
    %509 = vst [vmem:[%s472 + $0x120] sm:$0xff] %v394
    %510 = vst [vmem:[%s472 + $0x128] sm:$0xff] %v458
    %511 = vst [vmem:[%s472 + $0x130] sm:$0xff] %v395
    %512 = vst [vmem:[%s472 + $0x138] sm:$0xff] %v459
    %513 = vst [vmem:[%s472 + $0x140] sm:$0xff] %v396
    %514 = vst [vmem:[%s472 + $0x148] sm:$0xff] %v460
    %515 = vst [vmem:[%s472 + $0x150] sm:$0xff] %v397
    %516 = vst [vmem:[%s472 + $0x158] sm:$0xff] %v461
    %517 = vst [vmem:[%s472 + $0x160] sm:$0xff] %v398
    %518 = vst [vmem:[%s472 + $0x168] sm:$0xff] %v462
    %519 = vst [vmem:[%s472 + $0x170] sm:$0xff] %v399
    %520 = vst [vmem:[%s472 + $0x178] sm:$0xff] %v463
    %521 = vst [vmem:[%s472 + $0x180] sm:$0xff] %v400
    %522 = vst [vmem:[%s472 + $0x188] sm:$0xff] %v464
    %523 = vst [vmem:[%s472 + $0x190] sm:$0xff] %v401
    %524 = vst [vmem:[%s472 + $0x198] sm:$0xff] %v465
    %525 = vst [vmem:[%s472 + $0x1a0] sm:$0xff] %v402
    %526 = vst [vmem:[%s472 + $0x1a8] sm:$0xff] %v466
    %527 = vst [vmem:[%s472 + $0x1b0] sm:$0xff] %v403
    %528 = vst [vmem:[%s472 + $0x1b8] sm:$0xff] %v467
    %529 = vst [vmem:[%s472 + $0x1c0] sm:$0xff] %v404
    %530 = vst [vmem:[%s472 + $0x1c8] sm:$0xff] %v468
    %531 = vst [vmem:[%s472 + $0x1d0] sm:$0xff] %v405
    %532 = vst [vmem:[%s472 + $0x1d8] sm:$0xff] %v469
    %533 = vst [vmem:[%s472 + $0x1e0] sm:$0xff] %v406
    %534 = vst [vmem:[%s472 + $0x1e8] sm:$0xff] %v470
    %535 = vst [vmem:[%s472 + $0x1f0] sm:$0xff] %v407
    %536 = vst [vmem:[%s472 + $0x1f8] sm:$0xff] %v471
    // Predicated region
    $region10: #{tpu_custom_call.1} parent=1 // pred_check
      _
    $region11: #{tpu_custom_call.1} parent=1 // pred_check_branch
      %538 = sbr.rel (0) target = $region13
    $region12: #{tpu_custom_call.1} parent=1 // pred_region
      %s540 = ssub.s32 16384, 16384
      %541 = vsyncadd [#allocation4], %s540
      %s542 = sshll.u32 [#allocation5], 4
      %s543 = int_to_ptr.vmem [resolvable:$true] %s542
      %548 = dma.vmem_to_hbm [thread:$0]  %s543, 16384, %s1, [#allocation4], 256, 256, 16
    $region13: #{tpu_custom_call.1} parent=1 // pred_fallthru
      _
    // Predicated region
    $region14: #{tpu_custom_call.1} parent=1 // pred_check
      _
    $region15: #{tpu_custom_call.1} parent=1 // pred_check_branch
      %550 = sbr.rel (0) target = $region17
    $region16: #{tpu_custom_call.1} parent=1 // pred_region
      %551 = dma.done [#allocation4], 16384
    $region17: #{tpu_custom_call.1} parent=1 // pred_fallthru
      _
    %552 = vsyncpa [#allocation3], 1
    %553 = vsyncpa [#allocation4], 1

</llo_original>
